<compile_context>
chip_gen: v6e
topology: v6e:2x2x1
jax: 0.10.0
libtpu: 0.0.40
codegen_flags: <defaults>
</compile_context>

<pallas_src>
import functools

import jax
import jax.numpy as jnp
import numpy as np
from jax.experimental import pallas as pl
from jax.experimental.pallas import tpu as pltpu

LANES = 128  # vreg lane width; L (max_length) and V (output_size) are padded to this


def attn_decoder_kernel(H, L, tok_ref, emb_ref, wslab_ref, bslab_ref, enc_ref,
                        out_ref, h_scr, ep_scr):
    del tok_ref  # embedding gather is done by the emb index_map (scalar prefetch)
    t = pl.program_id(0)

    # One-time work: load initial hidden (stashed in enc row 127) and project the
    # encoder outputs through the attn-half of attn_combine (off the per-step
    # softmax critical path; rows >= L of enc_proj are never used because the
    # corresponding attention weights are masked to exactly 0).
    @pl.when(t == 0)
    def _init():
        h_scr[...] = enc_ref[LANES - 1:LANES, :]
        ep = jnp.dot(enc_ref[...].astype(jnp.bfloat16),
                     wslab_ref[4 * H:5 * H, 0:H],
                     preferred_element_type=jnp.float32)            # (128, H)
        ep_scr[...] = ep.astype(jnp.bfloat16)

    hid = h_scr[...]                                                 # (1, H) f32
    emb = emb_ref[...]                                               # (1, H) bf16

    # Fused prologue: one (1,2H) x (2H, 128+4H) bf16 dot produces
    #   [ attn logits (128) | emb half of combine (H) | GRU hidden gates gh (3H) ].
    xh = jnp.concatenate([emb, hid.astype(jnp.bfloat16)], axis=1)    # (1, 2H) bf16
    pro = (jnp.dot(xh, wslab_ref[0:2 * H, :], preferred_element_type=jnp.float32)
           + bslab_ref[0:1, :])                                      # (1, 128+4H) f32
    logits = pro[:, 0:LANES]
    emb_comb = pro[:, LANES:LANES + H]                               # incl. b_c
    gh = pro[:, LANES + H:LANES + 4 * H]                             # incl. b_h, [r|z|n]

    # Softmax over the padded 128 lanes, pad lanes masked (-inf in, exact 0 out).
    lane = jax.lax.broadcasted_iota(jnp.int32, (1, LANES), 1)
    logits = jnp.where(lane < L, logits, -1e30)
    m = jnp.max(logits, axis=1, keepdims=True)
    e = jnp.exp(logits - m)
    attn_w = e * pl.reciprocal(jnp.sum(e, axis=1, keepdims=True), approx=True)
    attn_w = jnp.where(lane < L, attn_w, 0.0)                        # exact-zero mask

    # attn half of combine, using the pre-projected encoder outputs.
    attn_proj = jnp.dot(attn_w.astype(jnp.bfloat16), ep_scr[...],
                        preferred_element_type=jnp.float32)          # (1, H)
    x = jnp.maximum(emb_comb + attn_proj, 0.0)                       # relu(combine)

    # Single-step GRU; input-side gates in one fused dot, gate lane order [r|z|n].
    gi = (jnp.dot(x.astype(jnp.bfloat16), wslab_ref[2 * H:3 * H, 0:LANES],
                  preferred_element_type=jnp.float32)
          + bslab_ref[1:2, 0:LANES])
    r = jax.nn.sigmoid(gi[:, 0:H] + gh[:, 0:H])
    z = jax.nn.sigmoid(gi[:, H:2 * H] + gh[:, H:2 * H])
    n = jnp.tanh(gi[:, 2 * H:3 * H] + r * gh[:, 2 * H:3 * H])
    new_h = (1.0 - z) * n + z * hid                                  # (1, H) f32
    h_scr[...] = new_h                                               # carry to next step

    # Output projection on padded 128 lanes.
    out_logits = (jnp.dot(new_h.astype(jnp.bfloat16), wslab_ref[3 * H:4 * H, 0:LANES],
                          preferred_element_type=jnp.float32)
                  + bslab_ref[2:3, 0:LANES])

    # Assemble the (8,128) slab in vregs; ONE unmasked full-tile store.
    slab = jnp.concatenate([
        out_logits,                                                           # row 0
        attn_w,                                                               # row 1
        jnp.concatenate([new_h, jnp.zeros((1, LANES - H), jnp.float32)], 1),  # row 2
        jnp.zeros((5, LANES), jnp.float32),                                   # rows 3..7
    ], axis=0)
    out_ref[...] = slab


def init_params(key, hidden_size, output_size, max_length):
    """Raw parameters (PyTorch-equivalent, stored transposed: (in, out))."""
    H, V, L = hidden_size, output_size, max_length
    ks = jax.random.split(key, 21)
    s = 0.1

    def w(k, shape):
        return jax.random.normal(k, shape, jnp.float32) * s

    return dict(
        embedding=w(ks[0], (V, H)),
        # attn: Linear(2H -> L), split into emb-half and hid-half
        wa_e=w(ks[1], (H, L)), wa_h=w(ks[2], (H, L)), b_a=w(ks[3], (1, L)),
        # attn_combine: Linear(2H -> H), split into emb-half and attn-half
        wc_e=w(ks[4], (H, H)), wc_a=w(ks[5], (H, H)), b_c=w(ks[6], (1, H)),
        # GRU (num_layers=1), r/z/n gates
        w_ir=w(ks[7], (H, H)), w_iz=w(ks[8], (H, H)), w_in=w(ks[9], (H, H)),
        b_ir=w(ks[10], (1, H)), b_iz=w(ks[11], (1, H)), b_in=w(ks[12], (1, H)),
        w_hr=w(ks[13], (H, H)), w_hz=w(ks[14], (H, H)), w_hn=w(ks[15], (H, H)),
        b_hr=w(ks[16], (1, H)), b_hz=w(ks[17], (1, H)), b_hn=w(ks[18], (1, H)),
        # out: Linear(H -> V)
        w_out=w(ks[19], (H, V)), b_out=w(ks[20], (1, V)),
    )


def pack_params(p, hidden_size):
    """Pack weights into one bf16 slab, biases into one f32 slab, embedding to bf16."""
    H = hidden_size
    W2 = LANES + 4 * H                     # prologue output width (256 for H=32)
    assert H % 16 == 0 and W2 % LANES == 0

    def padc(x, w=LANES):                  # zero-pad lane (last) dim to width w
        return jnp.pad(x, ((0, 0), (0, w - x.shape[1])))

    zH = jnp.zeros((H, H), jnp.float32)
    z3H = jnp.zeros((H, 3 * H), jnp.float32)

    # Prologue block (2H, W2): cols [0,128) attn; [128,128+H) combine-emb; rest W_h.
    wa = padc(jnp.concatenate([p["wa_e"], p["wa_h"]], axis=0))              # (2H,128)
    wce = jnp.concatenate([p["wc_e"], zH], axis=0)                          # (2H,H)
    wh = jnp.concatenate(
        [z3H, jnp.concatenate([p["w_hr"], p["w_hz"], p["w_hn"]], axis=1)], axis=0)
    pro_blk = jnp.concatenate([wa, wce, wh], axis=1)                        # (2H,W2)

    # Mid blocks (rows 2H..5H): W_i gates, w_out, wc_a — each 128-lane padded.
    wi = padc(jnp.concatenate([p["w_ir"], p["w_iz"], p["w_in"]], axis=1))   # (H,128)
    wo = padc(p["w_out"])                                                   # (H,128)
    wca = padc(p["wc_a"])                                                   # (H,128)
    mid = padc(jnp.concatenate([wi, wo, wca], axis=0), W2)                  # (3H,W2)

    wslab = jnp.concatenate([pro_blk, mid], axis=0).astype(jnp.bfloat16)    # (5H,W2)

    # Biases kept f32 (added post f32 accumulation): row 0 = prologue bias,
    # row 1 = GRU input gate bias, row 2 = out bias, rows 3..7 pad.
    b_pro = jnp.concatenate(
        [padc(p["b_a"]), p["b_c"],
         jnp.concatenate([p["b_hr"], p["b_hz"], p["b_hn"]], axis=1)], axis=1)  # (1,W2)
    b_i = padc(jnp.concatenate([p["b_ir"], p["b_iz"], p["b_in"]], axis=1), W2)
    b_o = padc(p["b_out"], W2)
    bslab = jnp.concatenate(
        [b_pro, b_i, b_o, jnp.zeros((5, W2), jnp.float32)], axis=0)         # (8,W2)

    emb_tbl = p["embedding"].astype(jnp.bfloat16)[:, None, :]               # (V,1,H)
    return wslab, bslab, emb_tbl


def attn_decoder_decode(tokens, hidden, encoder_outputs, packed):
    """Run T decoder steps in ONE pallas_call (tokens: (T,) int32, hidden: (1,1,H)).

    Returns (out (T,V), final_hidden (1,1,H), attn_weights (T,L)); T=1 is exactly
    the module's single-step forward.
    """
    wslab, bslab, emb_tbl = packed
    H = hidden.shape[-1]
    L = encoder_outputs.shape[0]
    V = emb_tbl.shape[0]
    W2 = wslab.shape[1]
    T = int(tokens.shape[0])
    assert L <= LANES - 1 and V <= LANES and wslab.shape == (5 * H, W2)

    # Clamp token ids (no runtime bounds check on the gather DMA).
    tokens = jnp.clip(jnp.asarray(tokens, jnp.int32).reshape(T), 0, V - 1)

    # Encoder outputs zero-padded to 128 rows; initial hidden stashed in row 127
    # (that row only ever multiplies exactly-zero attention weight).
    enc_hid = jnp.zeros((LANES, H), jnp.float32)
    enc_hid = enc_hid.at[:L].set(encoder_outputs)
    enc_hid = enc_hid.at[LANES - 1].set(hidden[0, 0])

    grid_spec = pltpu.PrefetchScalarGridSpec(
        num_scalar_prefetch=1,                 # token ids -> SMEM, drive the emb gather
        grid=(T,),
        in_specs=[
            pl.BlockSpec((None, 1, H), lambda t, tok: (tok[t], 0, 0)),   # embedding row
            pl.BlockSpec((5 * H, W2), lambda t, tok: (0, 0)),            # weight slab
            pl.BlockSpec((8, W2), lambda t, tok: (0, 0)),                # bias slab
            pl.BlockSpec((LANES, H), lambda t, tok: (0, 0)),             # enc (+hid row)
        ],
        out_specs=pl.BlockSpec((None, 8, LANES), lambda t, tok: (t, 0, 0)),
        scratch_shapes=[
            pltpu.VMEM((1, H), jnp.float32),          # hidden carry across steps
            pltpu.VMEM((LANES, H), jnp.bfloat16),     # enc @ wc_a, computed at t==0
        ],
    )

    slab = pl.pallas_call(
        functools.partial(attn_decoder_kernel, H, L),
        grid_spec=grid_spec,
        out_shape=jax.ShapeDtypeStruct((T, 8, LANES), jnp.float32),
        compiler_params=pltpu.CompilerParams(dimension_semantics=("arbitrary",)),
    )(tokens, emb_tbl, wslab, bslab, enc_hid)

    out = slab[:, 0, :V]                                  # (T, V)
    attn_w = slab[:, 1, :L]                               # (T, L)
    new_hidden = slab[T - 1, 2, :H].reshape(1, 1, H)
    return out, new_hidden, attn_w


def attn_decoder_forward(input_token, hidden, encoder_outputs, packed):
    """Single-step forward, matching the PyTorch module's signature/semantics."""
    tokens = jnp.asarray(input_token, jnp.int32).reshape(1)
    return attn_decoder_decode(tokens, hidden, encoder_outputs, packed)


# ----------------------------- references ----------------------------------------


def _bdot(a, b):
    return jnp.dot(a.astype(jnp.bfloat16), b.astype(jnp.bfloat16),
                   preferred_element_type=jnp.float32)


def _fdot(a, b):
    return jnp.dot(a, b, preferred_element_type=jnp.float32)


def reference_step(tok, hidden, encoder_outputs, p, bf16_dots=True):
    """Pure-JAX transcription of the module forward (one step)."""
    H = hidden.shape[-1]
    dot = _bdot if bf16_dots else _fdot
    emb = jnp.take(p["embedding"], tok, axis=0).reshape(1, H)
    hid = hidden[0]
    logits = dot(emb, p["wa_e"]) + dot(hid, p["wa_h"]) + p["b_a"]
    attn_w = jax.nn.softmax(logits, axis=1)
    attn_applied = dot(attn_w, encoder_outputs)
    x = jnp.maximum(dot(emb, p["wc_e"]) + dot(attn_applied, p["wc_a"]) + p["b_c"], 0.0)
    r = jax.nn.sigmoid(dot(x, p["w_ir"]) + p["b_ir"] + dot(hid, p["w_hr"]) + p["b_hr"])
    z = jax.nn.sigmoid(dot(x, p["w_iz"]) + p["b_iz"] + dot(hid, p["w_hz"]) + p["b_hz"])
    n = jnp.tanh(dot(x, p["w_in"]) + p["b_in"] + r * (dot(hid, p["w_hn"]) + p["b_hn"]))
    new_h = (1.0 - z) * n + z * hid
    out = dot(new_h, p["w_out"]) + p["b_out"]
    return out, new_h.reshape(1, 1, H), attn_w


if __name__ == "__main__":
    hidden_size = 32
    output_size = 16
    max_length = 20

    key = jax.random.PRNGKey(0)
    k_par, k_hid, k_enc, k_tok = jax.random.split(key, 4)

    params = init_params(k_par, hidden_size, output_size, max_length)
    packed = pack_params(params, hidden_size)

    hidden = jax.random.normal(k_hid, (1, 1, hidden_size), jnp.float32) * 0.1
    encoder_outputs = jax.random.normal(k_enc, (max_length, hidden_size), jnp.float32) * 0.1

    # ---- single step: exactly the module forward ---------------------------------
    input_token = jnp.array(3, dtype=jnp.int32)
    out, new_hidden, attn_w = attn_decoder_forward(
        input_token, hidden, encoder_outputs, packed)
    jax.block_until_ready((out, new_hidden, attn_w))

    assert out.shape == (1, output_size)
    assert new_hidden.shape == (1, 1, hidden_size)
    assert attn_w.shape == (1, max_length)

    # Tight check vs a reference that uses the same bf16-in / f32-acc dot numerics.
    rb_out, rb_hid, rb_attn = reference_step(input_token, hidden, encoder_outputs,
                                             params, bf16_dots=True)
    np.testing.assert_allclose(np.asarray(out), np.asarray(rb_out), rtol=2e-3, atol=2e-3)
    np.testing.assert_allclose(np.asarray(new_hidden), np.asarray(rb_hid), rtol=2e-3, atol=2e-3)
    np.testing.assert_allclose(np.asarray(attn_w), np.asarray(rb_attn), rtol=2e-3, atol=2e-3)

    # Looser check vs the pure-f32 module semantics (bounds the bf16-operand error).
    rf_out, rf_hid, rf_attn = reference_step(input_token, hidden, encoder_outputs,
                                             params, bf16_dots=False)
    np.testing.assert_allclose(np.asarray(out), np.asarray(rf_out), rtol=2e-2, atol=2e-2)
    np.testing.assert_allclose(np.asarray(new_hidden), np.asarray(rf_hid), rtol=2e-2, atol=2e-2)
    np.testing.assert_allclose(np.asarray(attn_w), np.asarray(rf_attn), rtol=2e-2, atol=2e-2)

    # ---- multi-step decode: time loop hoisted into the kernel ---------------------
    T = 6
    tokens = jax.random.randint(k_tok, (T,), 0, output_size, dtype=jnp.int32)
    outs, final_hidden, attn_ws = attn_decoder_decode(
        tokens, hidden, encoder_outputs, packed)
    jax.block_until_ready((outs, final_hidden, attn_ws))
    assert outs.shape == (T, output_size) and attn_ws.shape == (T, max_length)

    h = hidden
    ref_outs, ref_attns = [], []
    for i in range(T):
        o, h, aw = reference_step(tokens[i], h, encoder_outputs, params, bf16_dots=True)
        ref_outs.append(o)
        ref_attns.append(aw)
    np.testing.assert_allclose(np.asarray(outs), np.asarray(jnp.concatenate(ref_outs, 0)),
                               rtol=5e-3, atol=5e-3)
    np.testing.assert_allclose(np.asarray(attn_ws), np.asarray(jnp.concatenate(ref_attns, 0)),
                               rtol=5e-3, atol=5e-3)
    np.testing.assert_allclose(np.asarray(final_hidden), np.asarray(h), rtol=5e-3, atol=5e-3)

    print("KERNEL_OK")
</pallas_src>

<mosaic_0001>
module attributes {stable_mosaic.version = 11 : i64} {
  func.func @attn_decoder_kernel(%arg0: i32, %arg1: memref<1xi32, #tpu.memory_space<smem>>, %arg2: memref<1x1x32xbf16, #tpu.memory_space<vmem>>, %arg3: memref<160x256xbf16, #tpu.memory_space<vmem>>, %arg4: memref<8x256xf32, #tpu.memory_space<vmem>>, %arg5: memref<128x32xf32, #tpu.memory_space<vmem>>, %arg6: memref<1x8x128xf32, #tpu.memory_space<vmem>>, %arg7: memref<1x32xf32, #tpu.memory_space<vmem>>, %arg8: memref<128x32xbf16, #tpu.memory_space<vmem>>) attributes {dimension_semantics = [#tpu.dimension_semantics<arbitrary>], iteration_bounds = array<i64: 1>, scalar_prefetch = 1 : i64, scratch_operands = 2 : i64, tpu.core_type = #tpu.core_type<tc>, window_params = [{transform_indices = @transform_0, window_bounds = array<i64: 1, 1, 32>}, {pipeline_mode = #tpu.pipeline_mode<synchronous>, transform_indices = @transform_1, window_bounds = array<i64: 160, 256>}, {pipeline_mode = #tpu.pipeline_mode<synchronous>, transform_indices = @transform_2, window_bounds = array<i64: 8, 256>}, {pipeline_mode = #tpu.pipeline_mode<synchronous>, transform_indices = @transform_3, window_bounds = array<i64: 128, 32>}, {transform_indices = @transform_4, window_bounds = array<i64: 1, 8, 128>}]} {
    %c0_i32 = arith.constant 0 : i32
    %0 = arith.cmpi eq, %arg0, %c0_i32 : i32
    %1 = arith.extui %0 : i1 to i32
    %c0_i32_0 = arith.constant 0 : i32
    %2 = arith.cmpi ne, %1, %c0_i32_0 : i32
    scf.if %2 {
      %c127 = arith.constant 127 : index
      %c0_34 = arith.constant 0 : index
      %84 = vector.load %arg5[%c127, %c0_34] : memref<128x32xf32, #tpu.memory_space<vmem>>, vector<1x32xf32>
      %c0_35 = arith.constant 0 : index
      %c0_36 = arith.constant 0 : index
      %85 = vector.load %arg7[%c0_35, %c0_36] : memref<1x32xf32, #tpu.memory_space<vmem>>, vector<1x32xf32>
      tpu.vector_store %arg7[%c0_35, %c0_36], %84 {strides = array<i32>} : memref<1x32xf32, #tpu.memory_space<vmem>>, vector<1x32xf32>,
      %c0_37 = arith.constant 0 : index
      %c0_38 = arith.constant 0 : index
      %86 = vector.load %arg5[%c0_37, %c0_38] : memref<128x32xf32, #tpu.memory_space<vmem>>, vector<128x32xf32>
      %87 = arith.truncf %86 : vector<128x32xf32> to vector<128x32xbf16>
      %c128 = arith.constant 128 : index
      %c0_39 = arith.constant 0 : index
      %88 = vector.load %arg3[%c128, %c0_39] : memref<160x256xbf16, #tpu.memory_space<vmem>>, vector<32x32xbf16>
      %cst_40 = arith.constant dense<0.000000e+00> : vector<128x32xf32>
      %89 = tpu.matmul %87, %88, %cst_40 {dimension_numbers = #tpu.dot_dimension_numbers<[1], [0], [0], [1], [0, 0, 1, 1], [], []>} : vector<128x32xbf16>, vector<32x32xbf16>, vector<128x32xf32> -> vector<128x32xf32>
      %90 = arith.truncf %89 : vector<128x32xf32> to vector<128x32xbf16>
      %c0_41 = arith.constant 0 : index
      %c0_42 = arith.constant 0 : index
      %91 = vector.load %arg8[%c0_41, %c0_42] : memref<128x32xbf16, #tpu.memory_space<vmem>>, vector<128x32xbf16>
      tpu.vector_store %arg8[%c0_41, %c0_42], %90 {strides = array<i32>} : memref<128x32xbf16, #tpu.memory_space<vmem>>, vector<128x32xbf16>,
    } else {
    }
    %c0 = arith.constant 0 : index
    %c0_1 = arith.constant 0 : index
    %3 = vector.load %arg7[%c0, %c0_1] : memref<1x32xf32, #tpu.memory_space<vmem>>, vector<1x32xf32>
    %c0_2 = arith.constant 0 : index
    %c0_3 = arith.constant 0 : index
    %c0_4 = arith.constant 0 : index
    %4 = vector.load %arg2[%c0_2, %c0_3, %c0_4] : memref<1x1x32xbf16, #tpu.memory_space<vmem>>, vector<1x1x32xbf16>
    %5 = vector.shape_cast %4 : vector<1x1x32xbf16> to vector<1x32xbf16>
    %6 = arith.truncf %3 : vector<1x32xf32> to vector<1x32xbf16>
    %7 = tpu.concatenate %5, %6 in 1 : vector<1x32xbf16>, vector<1x32xbf16> -> vector<1x64xbf16>
    %c0_5 = arith.constant 0 : index
    %c0_6 = arith.constant 0 : index
    %8 = vector.load %arg3[%c0_5, %c0_6] : memref<160x256xbf16, #tpu.memory_space<vmem>>, vector<64x256xbf16>
    %cst = arith.constant dense<0.000000e+00> : vector<1x256xf32>
    %9 = tpu.matmul %7, %8, %cst {dimension_numbers = #tpu.dot_dimension_numbers<[1], [0], [0], [1], [0, 0, 1, 1], [], []>} : vector<1x64xbf16>, vector<64x256xbf16>, vector<1x256xf32> -> vector<1x256xf32>
    %c0_7 = arith.constant 0 : index
    %c0_8 = arith.constant 0 : index
    %10 = vector.load %arg4[%c0_7, %c0_8] : memref<8x256xf32, #tpu.memory_space<vmem>>, vector<1x256xf32>
    %11 = arith.addf %9, %10 : vector<1x256xf32>
    %12 = vector.extract_strided_slice %11 {offsets = [0, 0], sizes = [1, 128], strides = [1, 1]} : vector<1x256xf32> to vector<1x128xf32>
    %13 = vector.extract_strided_slice %11 {offsets = [0, 128], sizes = [1, 32], strides = [1, 1]} : vector<1x256xf32> to vector<1x32xf32>
    %14 = vector.extract_strided_slice %11 {offsets = [0, 160], sizes = [1, 96], strides = [1, 1]} : vector<1x256xf32> to vector<1x96xf32>
    %15 = tpu.iota {dimensions = array<i32: 1>} : vector<1x128xi32>
    %c20_i32 = arith.constant 20 : i32
    %16 = vector.broadcast %c20_i32 : i32 to vector<1x128xi32>
    %17 = arith.cmpi slt, %15, %16 : vector<1x128xi32>
    %cst_9 = arith.constant -1.000000e+30 : f32
    %18 = vector.broadcast %cst_9 : f32 to vector<1x128xf32>
    %19 = arith.select %17, %12, %18 : vector<1x128xi1>, vector<1x128xf32>
    %cst_10 = arith.constant dense<0xFF800000> : vector<1xf32>
    %20 = vector.multi_reduction <maximumf>, %19, %cst_10 [1] : vector<1x128xf32> to vector<1xf32>
    %21 = vector.shape_cast %20 : vector<1xf32> to vector<1x1xf32>
    %22 = vector.broadcast %21 : vector<1x1xf32> to vector<1x128xf32>
    %23 = arith.subf %19, %22 : vector<1x128xf32>
    %24 = math.exp %23 : vector<1x128xf32>
    %cst_11 = arith.constant dense<0.000000e+00> : vector<1xf32>
    %25 = vector.multi_reduction <add>, %24, %cst_11 [1] : vector<1x128xf32> to vector<1xf32>
    %26 = vector.shape_cast %25 : vector<1xf32> to vector<1x1xf32>
    %27 = tpu.reciprocal %26 {approx = true} : vector<1x1xf32> -> vector<1x1xf32>
    %28 = vector.broadcast %27 : vector<1x1xf32> to vector<1x128xf32>
    %29 = arith.mulf %24, %28 : vector<1x128xf32>
    %c20_i32_12 = arith.constant 20 : i32
    %30 = vector.broadcast %c20_i32_12 : i32 to vector<1x128xi32>
    %31 = arith.cmpi slt, %15, %30 : vector<1x128xi32>
    %cst_13 = arith.constant 0.000000e+00 : f32
    %32 = vector.broadcast %cst_13 : f32 to vector<1x128xf32>
    %33 = arith.select %31, %29, %32 : vector<1x128xi1>, vector<1x128xf32>
    %34 = arith.truncf %33 : vector<1x128xf32> to vector<1x128xbf16>
    %c0_14 = arith.constant 0 : index
    %c0_15 = arith.constant 0 : index
    %35 = vector.load %arg8[%c0_14, %c0_15] : memref<128x32xbf16, #tpu.memory_space<vmem>>, vector<128x32xbf16>
    %cst_16 = arith.constant dense<0.000000e+00> : vector<1x32xf32>
    %36 = tpu.matmul %34, %35, %cst_16 {dimension_numbers = #tpu.dot_dimension_numbers<[1], [0], [0], [1], [0, 0, 1, 1], [], []>} : vector<1x128xbf16>, vector<128x32xbf16>, vector<1x32xf32> -> vector<1x32xf32>
    %37 = arith.addf %13, %36 : vector<1x32xf32>
    %cst_17 = arith.constant 0.000000e+00 : f32
    %38 = vector.broadcast %cst_17 : f32 to vector<1x32xf32>
    %39 = arith.maximumf %37, %38 : vector<1x32xf32>
    %40 = arith.truncf %39 : vector<1x32xf32> to vector<1x32xbf16>
    %c64 = arith.constant 64 : index
    %c0_18 = arith.constant 0 : index
    %41 = vector.load %arg3[%c64, %c0_18] : memref<160x256xbf16, #tpu.memory_space<vmem>>, vector<32x128xbf16>
    %cst_19 = arith.constant dense<0.000000e+00> : vector<1x128xf32>
    %42 = tpu.matmul %40, %41, %cst_19 {dimension_numbers = #tpu.dot_dimension_numbers<[1], [0], [0], [1], [0, 0, 1, 1], [], []>} : vector<1x32xbf16>, vector<32x128xbf16>, vector<1x128xf32> -> vector<1x128xf32>
    %c1 = arith.constant 1 : index
    %c0_20 = arith.constant 0 : index
    %43 = vector.load %arg4[%c1, %c0_20] : memref<8x256xf32, #tpu.memory_space<vmem>>, vector<1x128xf32>
    %44 = arith.addf %42, %43 : vector<1x128xf32>
    %45 = vector.extract_strided_slice %44 {offsets = [0, 0], sizes = [1, 32], strides = [1, 1]} : vector<1x128xf32> to vector<1x32xf32>
    %46 = vector.extract_strided_slice %14 {offsets = [0, 0], sizes = [1, 32], strides = [1, 1]} : vector<1x96xf32> to vector<1x32xf32>
    %47 = arith.addf %45, %46 : vector<1x32xf32>
    %48 = arith.negf %47 : vector<1x32xf32>
    %49 = math.exp %48 : vector<1x32xf32>
    %cst_21 = arith.constant 1.000000e+00 : f32
    %50 = vector.broadcast %cst_21 : f32 to vector<1x32xf32>
    %51 = arith.addf %50, %49 : vector<1x32xf32>
    %52 = arith.divf %50, %51 : vector<1x32xf32>
    %53 = vector.extract_strided_slice %44 {offsets = [0, 32], sizes = [1, 32], strides = [1, 1]} : vector<1x128xf32> to vector<1x32xf32>
    %54 = vector.extract_strided_slice %14 {offsets = [0, 32], sizes = [1, 32], strides = [1, 1]} : vector<1x96xf32> to vector<1x32xf32>
    %55 = arith.addf %53, %54 : vector<1x32xf32>
    %56 = arith.negf %55 : vector<1x32xf32>
    %57 = math.exp %56 : vector<1x32xf32>
    %cst_22 = arith.constant 1.000000e+00 : f32
    %58 = vector.broadcast %cst_22 : f32 to vector<1x32xf32>
    %59 = arith.addf %58, %57 : vector<1x32xf32>
    %60 = arith.divf %58, %59 : vector<1x32xf32>
    %61 = vector.extract_strided_slice %44 {offsets = [0, 64], sizes = [1, 32], strides = [1, 1]} : vector<1x128xf32> to vector<1x32xf32>
    %62 = vector.extract_strided_slice %14 {offsets = [0, 64], sizes = [1, 32], strides = [1, 1]} : vector<1x96xf32> to vector<1x32xf32>
    %63 = arith.mulf %52, %62 : vector<1x32xf32>
    %64 = arith.addf %61, %63 : vector<1x32xf32>
    %65 = math.tanh %64 : vector<1x32xf32>
    %cst_23 = arith.constant 1.000000e+00 : f32
    %66 = vector.broadcast %cst_23 : f32 to vector<1x32xf32>
    %67 = arith.subf %66, %60 : vector<1x32xf32>
    %68 = arith.mulf %67, %65 : vector<1x32xf32>
    %69 = arith.mulf %60, %3 : vector<1x32xf32>
    %70 = arith.addf %68, %69 : vector<1x32xf32>
    %c0_24 = arith.constant 0 : index
    %c0_25 = arith.constant 0 : index
    %71 = vector.load %arg7[%c0_24, %c0_25] : memref<1x32xf32, #tpu.memory_space<vmem>>, vector<1x32xf32>
    tpu.vector_store %arg7[%c0_24, %c0_25], %70 {strides = array<i32>} : memref<1x32xf32, #tpu.memory_space<vmem>>, vector<1x32xf32>,
    %72 = arith.truncf %70 : vector<1x32xf32> to vector<1x32xbf16>
    %c96 = arith.constant 96 : index
    %c0_26 = arith.constant 0 : index
    %73 = vector.load %arg3[%c96, %c0_26] : memref<160x256xbf16, #tpu.memory_space<vmem>>, vector<32x128xbf16>
    %cst_27 = arith.constant dense<0.000000e+00> : vector<1x128xf32>
    %74 = tpu.matmul %72, %73, %cst_27 {dimension_numbers = #tpu.dot_dimension_numbers<[1], [0], [0], [1], [0, 0, 1, 1], [], []>} : vector<1x32xbf16>, vector<32x128xbf16>, vector<1x128xf32> -> vector<1x128xf32>
    %c2 = arith.constant 2 : index
    %c0_28 = arith.constant 0 : index
    %75 = vector.load %arg4[%c2, %c0_28] : memref<8x256xf32, #tpu.memory_space<vmem>>, vector<1x128xf32>
    %76 = arith.addf %74, %75 : vector<1x128xf32>
    %cst_29 = arith.constant 0.000000e+00 : f32
    %77 = vector.broadcast %cst_29 : f32 to vector<1x96xf32>
    %78 = tpu.concatenate %70, %77 in 1 : vector<1x32xf32>, vector<1x96xf32> -> vector<1x128xf32>
    %cst_30 = arith.constant 0.000000e+00 : f32
    %79 = vector.broadcast %cst_30 : f32 to vector<5x128xf32>
    %80 = tpu.concatenate %76, %33, %78, %79 in 0 : vector<1x128xf32>, vector<1x128xf32>, vector<1x128xf32>, vector<5x128xf32> -> vector<8x128xf32>
    %c0_31 = arith.constant 0 : index
    %c0_32 = arith.constant 0 : index
    %c0_33 = arith.constant 0 : index
    %81 = vector.load %arg6[%c0_31, %c0_32, %c0_33] : memref<1x8x128xf32, #tpu.memory_space<vmem>>, vector<1x8x128xf32>
    %82 = vector.shape_cast %81 : vector<1x8x128xf32> to vector<8x128xf32>
    %83 = vector.shape_cast %80 : vector<8x128xf32> to vector<1x8x128xf32>
    tpu.vector_store %arg6[%c0_31, %c0_32, %c0_33], %83 {strides = array<i32>} : memref<1x8x128xf32, #tpu.memory_space<vmem>>, vector<1x8x128xf32>,
    return
  }
  func.func @transform_0(%arg0: i32, %arg1: memref<1xi32, #tpu.memory_space<smem>>) -> (i32, i32, i32) {
    %0 = arith.index_cast %arg0 : i32 to index
    %1 = memref.load %arg1[%0] : memref<1xi32, #tpu.memory_space<smem>>
    %c0_i32 = arith.constant 0 : i32
    %c0_i32_0 = arith.constant 0 : i32
    %c0_i32_1 = arith.constant 0 : i32
    return %1, %c0_i32, %c0_i32_0 : i32, i32, i32
  }
  func.func @transform_1(%arg0: i32, %arg1: memref<1xi32, #tpu.memory_space<smem>>) -> (i32, i32) {
    %c0_i32 = arith.constant 0 : i32
    %c0_i32_0 = arith.constant 0 : i32
    %c0_i32_1 = arith.constant 0 : i32
    return %c0_i32, %c0_i32_0 : i32, i32
  }
  func.func @transform_2(%arg0: i32, %arg1: memref<1xi32, #tpu.memory_space<smem>>) -> (i32, i32) {
    %c0_i32 = arith.constant 0 : i32
    %c0_i32_0 = arith.constant 0 : i32
    %c0_i32_1 = arith.constant 0 : i32
    return %c0_i32, %c0_i32_0 : i32, i32
  }
  func.func @transform_3(%arg0: i32, %arg1: memref<1xi32, #tpu.memory_space<smem>>) -> (i32, i32) {
    %c0_i32 = arith.constant 0 : i32
    %c0_i32_0 = arith.constant 0 : i32
    %c0_i32_1 = arith.constant 0 : i32
    return %c0_i32, %c0_i32_0 : i32, i32
  }
  func.func @transform_4(%arg0: i32, %arg1: memref<1xi32, #tpu.memory_space<smem>>) -> (i32, i32, i32) {
    %c0_i32 = arith.constant 0 : i32
    %c0_i32_0 = arith.constant 0 : i32
    %c0_i32_1 = arith.constant 0 : i32
    return %arg0, %c0_i32, %c0_i32_0 : i32, i32, i32
  }
}

</mosaic_0001>

<llo_original>
// kernel: tpu_custom_call.1
$region0: #{tpu_custom_call.1}
  #allocation0 [shape = 'u32[]', space=smem, size = 0x4, offset = 0x4, fixed_abs, tag = 'smem constant byte address 0x4 - core index']
  #allocation1 [shape = 'u32[144,128]{1,0:T(1,128)}', space=vmem, size = 0x12000, scoped, tag = 'internal scratch']
  #allocation2 [shape = 'f32[1,32]{1,0:T(1,128)}', space=vmem, size = 0x200, scoped, tag = 'scratch operand']
  #allocation3 [shape = 'bf16[128,32]{1,0:T(8,128)(2,1)}', space=vmem, size = 0x8000, scoped, tag = 'scratch operand']
  #allocation4 [shape = 's32[1]{0}', space=sflag, size = 0x4, scoped, tag = 'scoped memory for tpu_custom_call.1']
  #allocation5 [shape = 's32[1]{0:T(128)S(6)}', space=smem, size = 0x200, scoped, tag = 'prefetched SMEM operand 0']
  %s0 = inlined_call_operand.<no memory space> [shape: s32[1], index: 0, kind: input, shape index: {}]
  %s1 = inlined_call_operand.vmem [shape: bf16[16,1,32], index: 1, kind: input, shape index: {}]
  %s2 = inlined_call_operand.vmem [shape: bf16[160,256], index: 2, kind: input, shape index: {}]
  %s3 = inlined_call_operand.vmem [shape: f32[8,256], index: 3, kind: input, shape index: {}]
  %s4 = inlined_call_operand.vmem [shape: f32[128,32], index: 4, kind: input, shape index: {}]
  %s5 = inlined_call_operand.hbm [shape: f32[1,8,128], index: 5, kind: output, shape index: {}]
  %s6 = sld [smem:[#allocation0]]
  $region30: #{tpu_custom_call.1} parent=0
    _
  %s8 = ssub.s32 1, %s6
  %s9 = scalar_select 0, %s8, %s6
  %10 = sst [smem:[#allocation5]] %s0
  $region1: #{tpu_custom_call.1} parent=0
    #allocation6 [shape = 'u8[4096]{0}', space=vmem, size = 0x1000, scoped, tag = 'output window, operand 0, single buffered']
    #allocation7 [shape = 's32[1]{0}', space=sflag, size = 0x4, scoped, tag = 'scoped memory for tpu_custom_call.1']
    %11 = vsyncpa [#allocation7], 0
    // Predicated region
    $region2: #{tpu_custom_call.1} parent=1 // pred_check
      _
    $region3: #{tpu_custom_call.1} parent=1 // pred_check_branch
      %13 = sbr.rel (0) target = $region5
    $region4: #{tpu_custom_call.1} parent=1 // pred_region
      %s14 = sld [smem:[#allocation5]]
      %p15 = scmp.lt.s32.totalorder %s14, 15
      %s16 = scalar_select %p15, %s14, 15
      %s17 = scalar_lea.vmem %s1, %s16
      %s18 = sld [smem:[#allocation5]]
    $region5: #{tpu_custom_call.1} parent=1 // pred_fallthru
      _
    // Predicated region
    $region6: #{tpu_custom_call.1} parent=1 // pred_check
      _
    $region7: #{tpu_custom_call.1} parent=1 // pred_check_branch
      %20 = sbr.rel (0) target = $region9
    $region8: #{tpu_custom_call.1} parent=1 // pred_region
      _
    $region9: #{tpu_custom_call.1} parent=1 // pred_fallthru
      _
    // Predicated region
    $region10: #{tpu_custom_call.1} parent=1 // pred_check
      _
    $region11: #{tpu_custom_call.1} parent=1 // pred_check_branch
      %22 = sbr.rel (0) target = $region13
    $region12: #{tpu_custom_call.1} parent=1 // pred_region
      _
    $region13: #{tpu_custom_call.1} parent=1 // pred_fallthru
      _
    // Predicated region
    $region14: #{tpu_custom_call.1} parent=1 // pred_check
      _
    $region15: #{tpu_custom_call.1} parent=1 // pred_check_branch
      %24 = sbr.rel (0) target = $region17
    $region16: #{tpu_custom_call.1} parent=1 // pred_region
      _
    $region17: #{tpu_custom_call.1} parent=1 // pred_fallthru
      _
    %s25 = sld [smem:[#allocation5]]
    %p26 = scmp.lt.s32.totalorder %s25, 15
    %s27 = scalar_select %p26, %s25, 15
    %s28 = scalar_lea.vmem %s1, %s27
    %s29 = sld [smem:[#allocation5]]
    %p30 = scmp.lt.s32.totalorder %s29, 15
    %s31 = scalar_select %p30, %s29, 15
    %s32 = scalar_lea.vmem %s1, %s31
    %s33 = sld [smem:[#allocation5]]
    %p35 = scmp.eq.s32.totalorder 0, 0
    // Predicated region
    $region18: #{tpu_custom_call.1} parent=1 // pred_check
      %p36 = pneg %p35
    $region19: #{tpu_custom_call.1} parent=1 // pred_check_branch
      %38 = sbr.rel (%p36) target = $region21
    $region20: #{tpu_custom_call.1} parent=1 // pred_region
      %v39 = vld [vmem:[%s4 + $0x7f] sm:$0x1]
      %vm40 = vcmask 253952
      %41 = vst.msk [vmem:[#allocation2] sm:$0x1] %vm40, %v39
      %v42 = vld [vmem:[%s4] sm:$0xff]
      %v43 = vld [vmem:[%s4 + $0x8] sm:$0xff]
      %v44 = vld [vmem:[%s4 + $0x10] sm:$0xff]
      %v45 = vld [vmem:[%s4 + $0x18] sm:$0xff]
      %v46 = vld [vmem:[%s4 + $0x20] sm:$0xff]
      %v47 = vld [vmem:[%s4 + $0x28] sm:$0xff]
      %v48 = vld [vmem:[%s4 + $0x30] sm:$0xff]
      %v49 = vld [vmem:[%s4 + $0x38] sm:$0xff]
      %v50 = vld [vmem:[%s4 + $0x40] sm:$0xff]
      %v51 = vld [vmem:[%s4 + $0x48] sm:$0xff]
      %v52 = vld [vmem:[%s4 + $0x50] sm:$0xff]
      %v53 = vld [vmem:[%s4 + $0x58] sm:$0xff]
      %v54 = vld [vmem:[%s4 + $0x60] sm:$0xff]
      %v55 = vld [vmem:[%s4 + $0x68] sm:$0xff]
      %v56 = vld [vmem:[%s4 + $0x70] sm:$0xff]
      %v57 = vld [vmem:[%s4 + $0x78] sm:$0xff]
      %v58 = vpack.c.bf16 %v43, %v42
      %v59 = vpack.c.bf16 %v45, %v44
      %v60 = vpack.c.bf16 %v47, %v46
      %v61 = vpack.c.bf16 %v49, %v48
      %v62 = vpack.c.bf16 %v51, %v50
      %v63 = vpack.c.bf16 %v53, %v52
      %v64 = vpack.c.bf16 %v55, %v54
      %v65 = vpack.c.bf16 %v57, %v56
      %v66 = vld [vmem:[%s2 + $0x80] sm:$0xf]
      %v67 = vld [vmem:[%s2 + $0x88] sm:$0xf]
      %v68 = vld [vmem:[%s2 + $0x90] sm:$0xf]
      %v69 = vld [vmem:[%s2 + $0x98] sm:$0xf]
      %v74 = vunpack.c.l.b16 %v66
      %v75 = vunpack.c.l.b16 %v67
      %v76 = vunpack.c.l.b16 %v68
      %v77 = vunpack.c.l.b16 %v69
      %v78 = vpack.c.b16 %v75, %v74
      %v79 = vpack.c.b16 %v77, %v76
      %vm82 = vcmask 261120
      %v84 = vsel %vm82, %v58, 0
      %v87 = vsel %vm82, %v59, 0
      %v90 = vsel %vm82, %v60, 0
      %v93 = vsel %vm82, %v61, 0
      %v96 = vsel %vm82, %v62, 0
      %v99 = vsel %vm82, %v63, 0
      %v102 = vsel %vm82, %v64, 0
      %v105 = vsel %vm82, %v65, 0
      %107 = vmatprep.subr.bf16.mxu0 0
      %108 = vmatpush1.bf16.msra.mxu0 0
      %109 = vmatprep.subr.bf16.mxu0 0
      %110 = vmatpush1.bf16.msra.mxu0 0
      %111 = vmatprep.subr.bf16.mxu0 0
      %112 = vmatpush1.bf16.msra.mxu0 0
      %113 = vmatprep.subr.bf16.mxu0 0
      %114 = vmatpush1.bf16.msra.mxu0 0
      %115 = vmatprep.subr.bf16.mxu0 0
      %116 = vmatpush1.bf16.msra.mxu0 0
      %117 = vmatprep.subr.bf16.mxu0 0
      %118 = vmatpush1.bf16.msra.mxu0 0
      %119 = vmatprep.subr.bf16.mxu0 0
      %120 = vmatpush1.bf16.msra.mxu0 %v79
      %121 = vmatprep.subr.bf16.mxu0 0
      %122 = vmatpush1.bf16.msra.mxu0 %v78
      %123 = vmatprep.subr.bf16.mxu0 0
      %124 = vmatpush2.bf16.msra.mxu0 0
      %125 = vmatprep.subr.bf16.mxu0 0
      %126 = vmatpush2.bf16.msra.mxu0 0
      %127 = vmatprep.subr.bf16.mxu0 0
      %128 = vmatpush2.bf16.msra.mxu0 0
      %129 = vmatprep.subr.bf16.mxu0 0
      %130 = vmatpush2.bf16.msra.mxu0 0
      %131 = vmatprep.subr.bf16.mxu0 0
      %132 = vmatpush2.bf16.msra.mxu0 0
      %133 = vmatprep.subr.bf16.mxu0 0
      %134 = vmatpush2.bf16.msra.mxu0 0
      %135 = vmatprep.subr.bf16.mxu0 0
      %136 = vmatpush2.bf16.msra.mxu0 0
      %137 = vmatprep.subr.bf16.mxu0 0
      %138 = vmatpush2.bf16.msra.mxu0 0
      %139 = vmatprep.mubr.bf16.mxu0 0
      %140 = vmatmul.mubr.bf16.gmra.mxu0 %v84
      %v141 = vpop.f32.mrf.mxu0
      %v142 = vadd.f32 0.0, %v141
      %v143 = vpop.f32.mrf.mxu0
      %v144 = vpop.f32.mrf.mxu0
      %v145 = vadd.f32 0.0, %v144
      %v146 = vpop.f32.mrf.mxu0
      %147 = vmatprep.mubr.bf16.mxu0 0
      %148 = vmatmul.mubr.bf16.gmra.mxu0 %v87
      %v149 = vpop.f32.mrf.mxu0
      %v150 = vadd.f32 0.0, %v149
      %v151 = vpop.f32.mrf.mxu0
      %v152 = vpop.f32.mrf.mxu0
      %v153 = vadd.f32 0.0, %v152
      %v154 = vpop.f32.mrf.mxu0
      %155 = vmatprep.mubr.bf16.mxu0 0
      %156 = vmatmul.mubr.bf16.gmra.mxu0 %v90
      %v157 = vpop.f32.mrf.mxu0
      %v158 = vadd.f32 0.0, %v157
      %v159 = vpop.f32.mrf.mxu0
      %v160 = vpop.f32.mrf.mxu0
      %v161 = vadd.f32 0.0, %v160
      %v162 = vpop.f32.mrf.mxu0
      %163 = vmatprep.mubr.bf16.mxu0 0
      %164 = vmatmul.mubr.bf16.gmra.mxu0 %v93
      %v165 = vpop.f32.mrf.mxu0
      %v166 = vadd.f32 0.0, %v165
      %v167 = vpop.f32.mrf.mxu0
      %v168 = vpop.f32.mrf.mxu0
      %v169 = vadd.f32 0.0, %v168
      %v170 = vpop.f32.mrf.mxu0
      %171 = vmatprep.mubr.bf16.mxu0 0
      %172 = vmatmul.mubr.bf16.gmra.mxu0 %v96
      %v173 = vpop.f32.mrf.mxu0
      %v174 = vadd.f32 0.0, %v173
      %v175 = vpop.f32.mrf.mxu0
      %v176 = vpop.f32.mrf.mxu0
      %v177 = vadd.f32 0.0, %v176
      %v178 = vpop.f32.mrf.mxu0
      %179 = vmatprep.mubr.bf16.mxu0 0
      %180 = vmatmul.mubr.bf16.gmra.mxu0 %v99
      %v181 = vpop.f32.mrf.mxu0
      %v182 = vadd.f32 0.0, %v181
      %v183 = vpop.f32.mrf.mxu0
      %v184 = vpop.f32.mrf.mxu0
      %v185 = vadd.f32 0.0, %v184
      %v186 = vpop.f32.mrf.mxu0
      %187 = vmatprep.mubr.bf16.mxu0 0
      %188 = vmatmul.mubr.bf16.gmra.mxu0 %v102
      %v189 = vpop.f32.mrf.mxu0
      %v190 = vadd.f32 0.0, %v189
      %v191 = vpop.f32.mrf.mxu0
      %v192 = vpop.f32.mrf.mxu0
      %v193 = vadd.f32 0.0, %v192
      %v194 = vpop.f32.mrf.mxu0
      %195 = vmatprep.mubr.bf16.mxu0 0
      %196 = vmatmul.mubr.bf16.gmra.mxu0 %v105
      %v197 = vpop.f32.mrf.mxu0
      %v198 = vadd.f32 0.0, %v197
      %v199 = vpop.f32.mrf.mxu0
      %v200 = vpop.f32.mrf.mxu0
      %v201 = vadd.f32 0.0, %v200
      %v202 = vpop.f32.mrf.mxu0
      %203 = vdwg.mxu0
      %v204 = vpack.c.bf16 %v145, %v142
      %v205 = vpack.c.bf16 %v153, %v150
      %v206 = vpack.c.bf16 %v161, %v158
      %v207 = vpack.c.bf16 %v169, %v166
      %v208 = vpack.c.bf16 %v177, %v174
      %v209 = vpack.c.bf16 %v185, %v182
      %v210 = vpack.c.bf16 %v193, %v190
      %v211 = vpack.c.bf16 %v201, %v198
      %v220 = vunpack.c.l.b16 %v204
      %v221 = vunpack.c.h.b16 %v204
      %v222 = vunpack.c.l.b16 %v205
      %v223 = vunpack.c.h.b16 %v205
      %v224 = vunpack.c.l.b16 %v206
      %v225 = vunpack.c.h.b16 %v206
      %v226 = vunpack.c.l.b16 %v207
      %v227 = vunpack.c.h.b16 %v207
      %v228 = vunpack.c.l.b16 %v208
      %v229 = vunpack.c.h.b16 %v208
      %v230 = vunpack.c.l.b16 %v209
      %v231 = vunpack.c.h.b16 %v209
      %v232 = vunpack.c.l.b16 %v210
      %v233 = vunpack.c.h.b16 %v210
      %v234 = vunpack.c.l.b16 %v211
      %v235 = vunpack.c.h.b16 %v211
      %v236 = vpack.c.b16 %v220, %v220
      %v237 = vpack.c.b16 %v221, %v221
      %v238 = vpack.c.b16 %v222, %v222
      %v239 = vpack.c.b16 %v223, %v223
      %v240 = vpack.c.b16 %v224, %v224
      %v241 = vpack.c.b16 %v225, %v225
      %v242 = vpack.c.b16 %v226, %v226
      %v243 = vpack.c.b16 %v227, %v227
      %v244 = vpack.c.b16 %v228, %v228
      %v245 = vpack.c.b16 %v229, %v229
      %v246 = vpack.c.b16 %v230, %v230
      %v247 = vpack.c.b16 %v231, %v231
      %v248 = vpack.c.b16 %v232, %v232
      %v249 = vpack.c.b16 %v233, %v233
      %v250 = vpack.c.b16 %v234, %v234
      %v251 = vpack.c.b16 %v235, %v235
      %vm268 = vcmask 257024
      %269 = vst.msk [vmem:[#allocation3] sm:$0xf] %vm268, %v236
      %270 = vst.msk [vmem:[#allocation3 + $0x4] sm:$0xf] %vm268, %v237
      %271 = vst.msk [vmem:[#allocation3 + $0x8] sm:$0xf] %vm268, %v238
      %272 = vst.msk [vmem:[#allocation3 + $0xc] sm:$0xf] %vm268, %v239
      %273 = vst.msk [vmem:[#allocation3 + $0x10] sm:$0xf] %vm268, %v240
      %274 = vst.msk [vmem:[#allocation3 + $0x14] sm:$0xf] %vm268, %v241
      %275 = vst.msk [vmem:[#allocation3 + $0x18] sm:$0xf] %vm268, %v242
      %276 = vst.msk [vmem:[#allocation3 + $0x1c] sm:$0xf] %vm268, %v243
      %277 = vst.msk [vmem:[#allocation3 + $0x20] sm:$0xf] %vm268, %v244
      %278 = vst.msk [vmem:[#allocation3 + $0x24] sm:$0xf] %vm268, %v245
      %279 = vst.msk [vmem:[#allocation3 + $0x28] sm:$0xf] %vm268, %v246
      %280 = vst.msk [vmem:[#allocation3 + $0x2c] sm:$0xf] %vm268, %v247
      %281 = vst.msk [vmem:[#allocation3 + $0x30] sm:$0xf] %vm268, %v248
      %282 = vst.msk [vmem:[#allocation3 + $0x34] sm:$0xf] %vm268, %v249
      %283 = vst.msk [vmem:[#allocation3 + $0x38] sm:$0xf] %vm268, %v250
      %284 = vst.msk [vmem:[#allocation3 + $0x3c] sm:$0xf] %vm268, %v251
    $region21: #{tpu_custom_call.1} parent=1 // pred_fallthru
      _
    %v285 = vld [vmem:[#allocation2] sm:$0x1]
    %v286 = vld [vmem:[%s32] sm:$0x1]
    %v287 = vpack.c.bf16 %v285, %v285
    %289 = vrot.lane.b32.xlu0 %v287, 32
    %v290 = vpop.permute.xlu0 %289
    %vm291 = vcmask 261120
    %v294 = vsel %vm291, %v286, %v290
    %v295 = vld [vmem:[%s2] sm:$0xff]
    %v296 = vld [vmem:[%s2 + $0x8] sm:$0xff]
    %v297 = vld [vmem:[%s2 + $0x10] sm:$0xff]
    %v298 = vld [vmem:[%s2 + $0x18] sm:$0xff]
    %v299 = vld [vmem:[%s2 + $0x20] sm:$0xff]
    %v300 = vld [vmem:[%s2 + $0x28] sm:$0xff]
    %v301 = vld [vmem:[%s2 + $0x30] sm:$0xff]
    %v302 = vld [vmem:[%s2 + $0x38] sm:$0xff]
    %v303 = vld [vmem:[%s3] ss:$8 sm:$0x3]
    %v312 = vunpack.c.l.b16 %v295
    %v313 = vunpack.c.h.b16 %v295
    %v314 = vunpack.c.l.b16 %v296
    %v315 = vunpack.c.h.b16 %v296
    %v316 = vunpack.c.l.b16 %v297
    %v317 = vunpack.c.h.b16 %v297
    %v318 = vunpack.c.l.b16 %v298
    %v319 = vunpack.c.h.b16 %v298
    %v320 = vunpack.c.l.b16 %v299
    %v321 = vunpack.c.h.b16 %v299
    %v322 = vunpack.c.l.b16 %v300
    %v323 = vunpack.c.h.b16 %v300
    %v324 = vunpack.c.l.b16 %v301
    %v325 = vunpack.c.h.b16 %v301
    %v326 = vunpack.c.l.b16 %v302
    %v327 = vunpack.c.h.b16 %v302
    %v328 = vpack.c.b16 %v314, %v312
    %v329 = vpack.c.b16 %v315, %v313
    %v330 = vpack.c.b16 %v318, %v316
    %v331 = vpack.c.b16 %v319, %v317
    %v332 = vpack.c.b16 %v322, %v320
    %v333 = vpack.c.b16 %v323, %v321
    %v334 = vpack.c.b16 %v326, %v324
    %v335 = vpack.c.b16 %v327, %v325
    %v345 = vlaneseq
    %v346 = vshrl.u32 %v345, 7
    %v347 = vsub.s32 0, %v346
    %v348 = vrot.slane %v303, %v347
    %v349 = vlaneseq
    %v350 = vshrl.u32 %v349, 7
    %v351 = vsub.s32 1, %v350
    %v352 = vrot.slane %v303, %v351
    %vm355 = vcmask 523264
    %v356 = vsel %vm355, %v294, 0
    %358 = vmatprep.subr.bf16.mxu0 0
    %359 = vmatpush1.bf16.msra.mxu0 0
    %360 = vmatprep.subr.bf16.mxu0 0
    %361 = vmatpush1.bf16.msra.mxu0 0
    %362 = vmatprep.subr.bf16.mxu0 0
    %363 = vmatpush1.bf16.msra.mxu0 0
    %364 = vmatprep.subr.bf16.mxu0 0
    %365 = vmatpush1.bf16.msra.mxu0 0
    %366 = vmatprep.subr.bf16.mxu0 %v335
    %367 = vmatpush1.bf16.msra.mxu0 %v334
    %368 = vmatprep.subr.bf16.mxu0 %v333
    %369 = vmatpush1.bf16.msra.mxu0 %v332
    %370 = vmatprep.subr.bf16.mxu0 %v331
    %371 = vmatpush1.bf16.msra.mxu0 %v330
    %372 = vmatprep.subr.bf16.mxu0 %v329
    %373 = vmatpush1.bf16.msra.mxu0 %v328
    %374 = vmatprep.subr.bf16.mxu0 0
    %375 = vmatpush2.bf16.msra.mxu0 0
    %376 = vmatprep.subr.bf16.mxu0 0
    %377 = vmatpush2.bf16.msra.mxu0 0
    %378 = vmatprep.subr.bf16.mxu0 0
    %379 = vmatpush2.bf16.msra.mxu0 0
    %380 = vmatprep.subr.bf16.mxu0 0
    %381 = vmatpush2.bf16.msra.mxu0 0
    %382 = vmatprep.subr.bf16.mxu0 0
    %383 = vmatpush2.bf16.msra.mxu0 0
    %384 = vmatprep.subr.bf16.mxu0 0
    %385 = vmatpush2.bf16.msra.mxu0 0
    %386 = vmatprep.subr.bf16.mxu0 0
    %387 = vmatpush2.bf16.msra.mxu0 0
    %388 = vmatprep.subr.bf16.mxu0 0
    %389 = vmatpush2.bf16.msra.mxu0 0
    %390 = vmatprep.mubr.bf16.mxu0 0
    %391 = vmatmul.mubr.bf16.gmra.mxu0 %v356
    %v392 = vpop.f32.mrf.mxu0
    %v393 = vadd.f32 %v348, %v392
    %v394 = vpop.f32.mrf.mxu0
    %v395 = vadd.f32 %v352, %v394
    %v396 = vpop.f32.mrf.mxu0
    %v397 = vpop.f32.mrf.mxu0
    %398 = vdwg.mxu0
    %v399 = vlaneseq
    %v400 = vand.u32 %v399, 127
    %vm401 = vcmp.lt.s32.totalorder %v400, 20
    %v402 = vsel %vm401, %v393, -1e+30
    %vm403 = vcmask 1040384
    %v404 = vsel %vm403, %v402, -inf
    %405 = vmax.xlane.f32.xlu0 %v404
    %v406 = vpop.xlane.xlu0 %405
    %v407 = vsub.f32 %v402, %v406
    %v408 = vmul.f32 %v407, 1.442695
    %v409 = vpow.pop %v408
    %v410 = vsel %vm403, %v409, 0.0
    %411 = vadd.xlane.f32.xlu0 %v410
    %v412 = vpop.xlane.xlu0 %411
    %v413 = vrcp.pop %v412
    %v414 = vmul.f32 %v409, %v413
    %v415 = vsel %vm401, %v414, 0.0
    %v416 = vpack.c.bf16 %v415, %v415
    %v417 = vld [vmem:[#allocation3] sm:$0xf]
    %v418 = vld [vmem:[#allocation3 + $0x4] sm:$0xf]
    %v419 = vld [vmem:[#allocation3 + $0x8] sm:$0xf]
    %v420 = vld [vmem:[#allocation3 + $0xc] sm:$0xf]
    %v421 = vld [vmem:[#allocation3 + $0x10] sm:$0xf]
    %v422 = vld [vmem:[#allocation3 + $0x14] sm:$0xf]
    %v423 = vld [vmem:[#allocation3 + $0x18] sm:$0xf]
    %v424 = vld [vmem:[#allocation3 + $0x1c] sm:$0xf]
    %v425 = vld [vmem:[#allocation3 + $0x20] sm:$0xf]
    %v426 = vld [vmem:[#allocation3 + $0x24] sm:$0xf]
    %v427 = vld [vmem:[#allocation3 + $0x28] sm:$0xf]
    %v428 = vld [vmem:[#allocation3 + $0x2c] sm:$0xf]
    %v429 = vld [vmem:[#allocation3 + $0x30] sm:$0xf]
    %v430 = vld [vmem:[#allocation3 + $0x34] sm:$0xf]
    %v431 = vld [vmem:[#allocation3 + $0x38] sm:$0xf]
    %v432 = vld [vmem:[#allocation3 + $0x3c] sm:$0xf]
    %v449 = vunpack.c.l.b16 %v417
    %v450 = vunpack.c.l.b16 %v418
    %v451 = vunpack.c.l.b16 %v419
    %v452 = vunpack.c.l.b16 %v420
    %v453 = vunpack.c.l.b16 %v421
    %v454 = vunpack.c.l.b16 %v422
    %v455 = vunpack.c.l.b16 %v423
    %v456 = vunpack.c.l.b16 %v424
    %v457 = vunpack.c.l.b16 %v425
    %v458 = vunpack.c.l.b16 %v426
    %v459 = vunpack.c.l.b16 %v427
    %v460 = vunpack.c.l.b16 %v428
    %v461 = vunpack.c.l.b16 %v429
    %v462 = vunpack.c.l.b16 %v430
    %v463 = vunpack.c.l.b16 %v431
    %v464 = vunpack.c.l.b16 %v432
    %v465 = vpack.c.b16 %v450, %v449
    %v466 = vpack.c.b16 %v452, %v451
    %v467 = vpack.c.b16 %v454, %v453
    %v468 = vpack.c.b16 %v456, %v455
    %v469 = vpack.c.b16 %v458, %v457
    %v470 = vpack.c.b16 %v460, %v459
    %v471 = vpack.c.b16 %v462, %v461
    %v472 = vpack.c.b16 %v464, %v463
    %481 = vmatprep.subr.bf16.mxu0 0
    %482 = vmatpush1.bf16.msra.mxu0 %v472
    %483 = vmatprep.subr.bf16.mxu0 0
    %484 = vmatpush1.bf16.msra.mxu0 %v471
    %485 = vmatprep.subr.bf16.mxu0 0
    %486 = vmatpush1.bf16.msra.mxu0 %v470
    %487 = vmatprep.subr.bf16.mxu0 0
    %488 = vmatpush1.bf16.msra.mxu0 %v469
    %489 = vmatprep.subr.bf16.mxu0 0
    %490 = vmatpush1.bf16.msra.mxu0 %v468
    %491 = vmatprep.subr.bf16.mxu0 0
    %492 = vmatpush1.bf16.msra.mxu0 %v467
    %493 = vmatprep.subr.bf16.mxu0 0
    %494 = vmatpush1.bf16.msra.mxu0 %v466
    %495 = vmatprep.subr.bf16.mxu0 0
    %496 = vmatpush1.bf16.msra.mxu0 %v465
    %497 = vmatprep.subr.bf16.mxu0 0
    %498 = vmatpush2.bf16.msra.mxu0 0
    %499 = vmatprep.subr.bf16.mxu0 0
    %500 = vmatpush2.bf16.msra.mxu0 0
    %501 = vmatprep.subr.bf16.mxu0 0
    %502 = vmatpush2.bf16.msra.mxu0 0
    %503 = vmatprep.subr.bf16.mxu0 0
    %504 = vmatpush2.bf16.msra.mxu0 0
    %505 = vmatprep.subr.bf16.mxu0 0
    %506 = vmatpush2.bf16.msra.mxu0 0
    %507 = vmatprep.subr.bf16.mxu0 0
    %508 = vmatpush2.bf16.msra.mxu0 0
    %509 = vmatprep.subr.bf16.mxu0 0
    %510 = vmatpush2.bf16.msra.mxu0 0
    %511 = vmatprep.subr.bf16.mxu0 0
    %512 = vmatpush2.bf16.msra.mxu0 0
    %513 = vmatprep.mubr.bf16.mxu0 0
    %514 = vmatmul.mubr.bf16.gmra.mxu0 %v416
    %v515 = vpop.f32.mrf.mxu0
    %v516 = vadd.f32 0.0, %v515
    %v517 = vpop.f32.mrf.mxu0
    %v518 = vpop.f32.mrf.mxu0
    %v519 = vpop.f32.mrf.mxu0
    %520 = vdwg.mxu0
    %v521 = vadd.f32 %v395, %v516
    %v522 = vmax.f32 %v521, 0.0
    %v523 = vpack.c.bf16 %v522, %v522
    %v524 = vld [vmem:[%s2 + $0x40] sm:$0xf]
    %v525 = vld [vmem:[%s2 + $0x48] sm:$0xf]
    %v526 = vld [vmem:[%s2 + $0x50] sm:$0xf]
    %v527 = vld [vmem:[%s2 + $0x58] sm:$0xf]
    %v528 = vld [vmem:[%s3 + $0x1] ss:$0 sm:$0xff]
    %v533 = vunpack.c.l.b16 %v524
    %v534 = vunpack.c.l.b16 %v525
    %v535 = vunpack.c.l.b16 %v526
    %v536 = vunpack.c.l.b16 %v527
    %v537 = vpack.c.b16 %v534, %v533
    %v538 = vpack.c.b16 %v536, %v535
    %v542 = vsel %vm291, %v523, 0
    %544 = vmatprep.subr.bf16.mxu0 0
    %545 = vmatpush1.bf16.msra.mxu0 0
    %546 = vmatprep.subr.bf16.mxu0 0
    %547 = vmatpush1.bf16.msra.mxu0 0
    %548 = vmatprep.subr.bf16.mxu0 0
    %549 = vmatpush1.bf16.msra.mxu0 0
    %550 = vmatprep.subr.bf16.mxu0 0
    %551 = vmatpush1.bf16.msra.mxu0 0
    %552 = vmatprep.subr.bf16.mxu0 0
    %553 = vmatpush1.bf16.msra.mxu0 0
    %554 = vmatprep.subr.bf16.mxu0 0
    %555 = vmatpush1.bf16.msra.mxu0 0
    %556 = vmatprep.subr.bf16.mxu0 0
    %557 = vmatpush1.bf16.msra.mxu0 %v538
    %558 = vmatprep.subr.bf16.mxu0 0
    %559 = vmatpush1.bf16.msra.mxu0 %v537
    %560 = vmatprep.subr.bf16.mxu0 0
    %561 = vmatpush2.bf16.msra.mxu0 0
    %562 = vmatprep.subr.bf16.mxu0 0
    %563 = vmatpush2.bf16.msra.mxu0 0
    %564 = vmatprep.subr.bf16.mxu0 0
    %565 = vmatpush2.bf16.msra.mxu0 0
    %566 = vmatprep.subr.bf16.mxu0 0
    %567 = vmatpush2.bf16.msra.mxu0 0
    %568 = vmatprep.subr.bf16.mxu0 0
    %569 = vmatpush2.bf16.msra.mxu0 0
    %570 = vmatprep.subr.bf16.mxu0 0
    %571 = vmatpush2.bf16.msra.mxu0 0
    %572 = vmatprep.subr.bf16.mxu0 0
    %573 = vmatpush2.bf16.msra.mxu0 0
    %574 = vmatprep.subr.bf16.mxu0 0
    %575 = vmatpush2.bf16.msra.mxu0 0
    %576 = vmatprep.mubr.bf16.mxu0 0
    %577 = vmatmul.mubr.bf16.gmra.mxu0 %v542
    %v578 = vpop.f32.mrf.mxu0
    %v579 = vadd.f32 %v528, %v578
    %v580 = vpop.f32.mrf.mxu0
    %v581 = vpop.f32.mrf.mxu0
    %v582 = vpop.f32.mrf.mxu0
    %583 = vdwg.mxu0
    %585 = vrot.lane.b32.xlu0 %v395, 96
    %v586 = vpop.permute.xlu0 %585
    %v588 = vadd.f32 %v579, %v586
    %v589 = vxor.u32 %v588, 2147483648
    %v590 = vmul.f32 %v589, 1.442695
    %v591 = vpow.pop %v590
    %v592 = vadd.f32 %v591, 1.0
    %v593 = vrcp.pop %v592
    %v594 = vmul.f32 1.0, %v593
    %595 = vrot.lane.b32.xlu0 %v395, 32
    %v596 = vpop.permute.xlu0 %595
    %v598 = vmul.f32 %v594, %v596
    %600 = vrot.lane.b32.xlu0 %v598, 64
    %v601 = vpop.permute.xlu0 %600
    %v603 = vadd.f32 %v579, %v601
    %v604 = vtanh.pop %v603
    %v605 = vsub.f32 1.0, %v594
    %607 = vrot.lane.b32.xlu0 %v604, 96
    %v608 = vpop.permute.xlu0 %607
    %v610 = vmul.f32 %v605, %v608
    %v612 = vlaneseq
    %v613 = vshrl.u32 %v612, 7
    %v614 = vsub.s32 0, %v613
    %v615 = vrot.slane %v285, %v614
    %616 = vrot.lane.b32.xlu0 %v615, 32
    %v617 = vpop.permute.xlu0 %616
    %v619 = vmul.f32 %v594, %v617
    %v620 = vadd.f32 %v610, %v619
    %622 = vrot.lane.b32.xlu0 %v620, 96
    %v623 = vpop.permute.xlu0 %622
    %vm625 = vcmask 253952
    %626 = vst.msk [vmem:[#allocation2] sm:$0x1] %vm625, %v623
    %v627 = vpack.c.bf16 %v620, %v620
    %v628 = vld [vmem:[%s2 + $0x60] sm:$0xf]
    %v629 = vld [vmem:[%s2 + $0x68] sm:$0xf]
    %v630 = vld [vmem:[%s2 + $0x70] sm:$0xf]
    %v631 = vld [vmem:[%s2 + $0x78] sm:$0xf]
    %v632 = vld [vmem:[%s3 + $0x2] ss:$0 sm:$0xff]
    %634 = vrot.lane.b32.xlu0 %v627, 96
    %v635 = vpop.permute.xlu0 %634
    %v640 = vunpack.c.l.b16 %v628
    %v641 = vunpack.c.l.b16 %v629
    %v642 = vunpack.c.l.b16 %v630
    %v643 = vunpack.c.l.b16 %v631
    %v644 = vpack.c.b16 %v641, %v640
    %v645 = vpack.c.b16 %v643, %v642
    %v649 = vsel %vm291, %v635, 0
    %651 = vmatprep.subr.bf16.mxu0 0
    %652 = vmatpush1.bf16.msra.mxu0 0
    %653 = vmatprep.subr.bf16.mxu0 0
    %654 = vmatpush1.bf16.msra.mxu0 0
    %655 = vmatprep.subr.bf16.mxu0 0
    %656 = vmatpush1.bf16.msra.mxu0 0
    %657 = vmatprep.subr.bf16.mxu0 0
    %658 = vmatpush1.bf16.msra.mxu0 0
    %659 = vmatprep.subr.bf16.mxu0 0
    %660 = vmatpush1.bf16.msra.mxu0 0
    %661 = vmatprep.subr.bf16.mxu0 0
    %662 = vmatpush1.bf16.msra.mxu0 0
    %663 = vmatprep.subr.bf16.mxu0 0
    %664 = vmatpush1.bf16.msra.mxu0 %v645
    %665 = vmatprep.subr.bf16.mxu0 0
    %666 = vmatpush1.bf16.msra.mxu0 %v644
    %667 = vmatprep.subr.bf16.mxu0 0
    %668 = vmatpush2.bf16.msra.mxu0 0
    %669 = vmatprep.subr.bf16.mxu0 0
    %670 = vmatpush2.bf16.msra.mxu0 0
    %671 = vmatprep.subr.bf16.mxu0 0
    %672 = vmatpush2.bf16.msra.mxu0 0
    %673 = vmatprep.subr.bf16.mxu0 0
    %674 = vmatpush2.bf16.msra.mxu0 0
    %675 = vmatprep.subr.bf16.mxu0 0
    %676 = vmatpush2.bf16.msra.mxu0 0
    %677 = vmatprep.subr.bf16.mxu0 0
    %678 = vmatpush2.bf16.msra.mxu0 0
    %679 = vmatprep.subr.bf16.mxu0 0
    %680 = vmatpush2.bf16.msra.mxu0 0
    %681 = vmatprep.subr.bf16.mxu0 0
    %682 = vmatpush2.bf16.msra.mxu0 0
    %683 = vmatprep.mubr.bf16.mxu0 0
    %684 = vmatmul.mubr.bf16.gmra.mxu0 %v649
    %v685 = vpop.f32.mrf.mxu0
    %v686 = vadd.f32 %v632, %v685
    %v687 = vpop.f32.mrf.mxu0
    %v688 = vpop.f32.mrf.mxu0
    %v689 = vpop.f32.mrf.mxu0
    %690 = vdwg.mxu0
    %v691 = vsel %vm291, %v623, 0.0
    %v693 = vrot.slane %v415, 7
    %v696 = vrot.slane %v691, 6
    %v698 = vsel %vm403, %v686, %v693
    %vm699 = vcmask 1041408
    %v700 = vsel %vm699, %v698, %v696
    %vm701 = vcmask 1042432
    %v702 = vsel %vm701, %v700, 0.0
    %703 = vst [vmem:[#allocation6] sm:$0xff] %v702
    // Predicated region
    $region22: #{tpu_custom_call.1} parent=1 // pred_check
      _
    $region23: #{tpu_custom_call.1} parent=1 // pred_check_branch
      %705 = sbr.rel (0) target = $region25
    $region24: #{tpu_custom_call.1} parent=1 // pred_region
      %s707 = ssub.s32 128, 128
      %708 = vsyncadd [#allocation7], %s707
      %s710 = sshll.u32 [#allocation6], 4
      %s711 = int_to_ptr.vmem [resolvable:$true] %s710
      %713 = dma.vmem_to_hbm [thread:$0]  %s711, 128, %s5, [#allocation7]
    $region25: #{tpu_custom_call.1} parent=1 // pred_fallthru
      _
    // Predicated region
    $region26: #{tpu_custom_call.1} parent=1 // pred_check
      _
    $region27: #{tpu_custom_call.1} parent=1 // pred_check_branch
      %715 = sbr.rel (0) target = $region29
    $region28: #{tpu_custom_call.1} parent=1 // pred_region
      %716 = dma.done [#allocation7], 128
    $region29: #{tpu_custom_call.1} parent=1 // pred_fallthru
      _
    %717 = vsyncpa [#allocation7], 1

</llo_original>
